<compile_context>
chip_gen: v6e
topology: v6e:2x2x1
jax: 0.10.0
libtpu: 0.0.40
codegen_flags: <defaults>
</compile_context>

<pallas_src>
import functools

import jax
import jax.numpy as jnp
from jax.experimental import pallas as pl
from jax.experimental.pallas import tpu as pltpu

# Byte budget for one input block (double-buffered by the pipeline, so stays
# comfortably under the default scoped-VMEM limit on v5e/v6e/v7x).
_ROW_BLOCK_BYTES = 2 << 20  # 2 MiB


def _zero_pad_kernel(x_ref, o_ref, *, pad_c):
    # x_ref : (R, W, C)      R output rows' worth of even-H input rows (full W, C)
    # o_ref : (R, Wo, Cout)  Wo = W // 2, Cout = C + 2 * pad_c
    R, Wo, Cout = o_ref.shape
    C = x_ref.shape[-1]
    # Stride-2 pick along W (the sublane dim): strided sublane read, no MXU,
    # native dtype end-to-end.
    x_even = x_ref[:, pl.ds(0, Wo, stride=2), :]            # (R, Wo, C)
    o_ref[...] = jnp.zeros((R, Wo, Cout), o_ref.dtype)      # channel pad = zeros
    o_ref[:, :, pad_c:pad_c + C] = x_even.astype(o_ref.dtype)


def _row_block(h_out, row_bytes):
    """Largest divisor of h_out whose input block stays under the byte budget."""
    best = 1
    for d in range(1, h_out + 1):
        if h_out % d == 0 and d * row_bytes <= _ROW_BLOCK_BYTES:
            best = d
    return best


@functools.partial(jax.jit, static_argnums=(1,))
def zero_padding_layer(x_nchw, pad_c=2):
    """x -> zero-pad(x[:, :, ::2, ::2]) with pad_c channels added on each side."""
    N, C, H, W = x_nchw.shape
    assert H % 2 == 0 and W % 2 == 0, (
        "ResNet option-A shortcut expects even spatial dims")
    Ho, Wo = H // 2, W // 2
    Cout = C + 2 * pad_c

    # NHWC: C on the lane dim, W on sublanes -> the W stride-2 is a sublane
    # selection and the channel pad is a lane-range store.
    x_nhwc = jnp.transpose(x_nchw, (0, 2, 3, 1))            # (N, H, W, C)
    # Pair even/odd H rows; the squeezed pair-dim (block index 0) below makes
    # the pipeline DMA only the even rows.
    x_pairs = x_nhwc.reshape(N, Ho, 2, W, C)

    itemsize = jnp.dtype(x_nchw.dtype).itemsize
    R = _row_block(Ho, W * C * itemsize)
    grid = (N, Ho // R)

    out_nhwc = pl.pallas_call(
        functools.partial(_zero_pad_kernel, pad_c=pad_c),
        out_shape=jax.ShapeDtypeStruct((N, Ho, Wo, Cout), x_nchw.dtype),
        grid=grid,
        in_specs=[
            pl.BlockSpec((None, R, None, W, C),
                         lambda n, r: (n, r, 0, 0, 0)),
        ],
        out_specs=pl.BlockSpec((None, R, Wo, Cout),
                               lambda n, r: (n, r, 0, 0)),
        compiler_params=pltpu.CompilerParams(
            dimension_semantics=("parallel", "parallel")),
    )(x_pairs)

    # TODO(synk): if the surrounding model is kept NHWC, drop both transposes —
    # they are the remaining extra HBM round trips for this memory-bound op.
    return jnp.transpose(out_nhwc, (0, 3, 1, 2))            # back to NCHW


if __name__ == "__main__":
    key = jax.random.PRNGKey(0)
    N, C, H, W = 2, 4, 16, 16
    pad_c = 2
    x = jax.random.normal(key, (N, C, H, W), dtype=jnp.float32)

    out = jax.block_until_ready(zero_padding_layer(x, pad_c))

    # Pure-JAX reference of the same zero_pad_func semantics.
    ref = jnp.pad(x[:, :, ::2, ::2], ((0, 0), (pad_c, pad_c), (0, 0), (0, 0)))
    assert out.shape == ref.shape, (out.shape, ref.shape)
    assert jnp.array_equal(out, ref), "mismatch vs pure-JAX reference"
    print("KERNEL_OK")
</pallas_src>

<mosaic_0001>
module attributes {stable_mosaic.version = 11 : i64} {
  func.func @_zero_pad_kernel(%arg0: i32, %arg1: i32, %arg2: memref<1x8x1x16x4xf32, #tpu.memory_space<vmem>>, %arg3: memref<1x8x8x8xf32, #tpu.memory_space<vmem>>) attributes {dimension_semantics = [#tpu.dimension_semantics<parallel>, #tpu.dimension_semantics<parallel>], iteration_bounds = array<i64: 2, 1>, scalar_prefetch = 0 : i64, scratch_operands = 0 : i64, tpu.core_type = #tpu.core_type<tc>, window_params = [{transform_indices = @transform_0, window_bounds = array<i64: 1, 8, 1, 16, 4>}, {transform_indices = @transform_1, window_bounds = array<i64: 1, 8, 8, 8>}]} {
    %c0 = arith.constant 0 : index
    %c0_0 = arith.constant 0 : index
    %c0_1 = arith.constant 0 : index
    %c0_2 = arith.constant 0 : index
    %c0_3 = arith.constant 0 : index
    %0 = tpu.strided_load %arg2[%c0, %c0_0, %c0_1, %c0_2, %c0_3] {strides = array<i32: 1, 1, 1, 2, 1>} : memref<1x8x1x16x4xf32, #tpu.memory_space<vmem>>, vector<1x8x1x8x4xf32>
    %1 = vector.shape_cast %0 : vector<1x8x1x8x4xf32> to vector<8x8x4xf32>
    %cst = arith.constant 0.000000e+00 : f32
    %2 = vector.broadcast %cst : f32 to vector<8x8x8xf32>
    %c0_4 = arith.constant 0 : index
    %c0_5 = arith.constant 0 : index
    %c0_6 = arith.constant 0 : index
    %c0_7 = arith.constant 0 : index
    %3 = vector.load %arg3[%c0_4, %c0_5, %c0_6, %c0_7] : memref<1x8x8x8xf32, #tpu.memory_space<vmem>>, vector<1x8x8x8xf32>
    %4 = vector.shape_cast %3 : vector<1x8x8x8xf32> to vector<8x8x8xf32>
    %5 = vector.shape_cast %2 : vector<8x8x8xf32> to vector<1x8x8x8xf32>
    tpu.vector_store %arg3[%c0_4, %c0_5, %c0_6, %c0_7], %5 {strides = array<i32>} : memref<1x8x8x8xf32, #tpu.memory_space<vmem>>, vector<1x8x8x8xf32>,
    %c0_8 = arith.constant 0 : index
    %c0_9 = arith.constant 0 : index
    %c0_10 = arith.constant 0 : index
    %c2 = arith.constant 2 : index
    %6 = vector.load %arg3[%c0_8, %c0_9, %c0_10, %c2] : memref<1x8x8x8xf32, #tpu.memory_space<vmem>>, vector<1x8x8x4xf32>
    %7 = vector.shape_cast %6 : vector<1x8x8x4xf32> to vector<8x8x4xf32>
    %8 = vector.shape_cast %1 : vector<8x8x4xf32> to vector<1x8x8x4xf32>
    tpu.vector_store %arg3[%c0_8, %c0_9, %c0_10, %c2], %8 {strides = array<i32>} : memref<1x8x8x8xf32, #tpu.memory_space<vmem>>, vector<1x8x8x4xf32>,
    return
  }
  func.func @transform_0(%arg0: i32, %arg1: i32) -> (i32, i32, i32, i32, i32) {
    %c0_i32 = arith.constant 0 : i32
    %c0_i32_0 = arith.constant 0 : i32
    %c0_i32_1 = arith.constant 0 : i32
    %c0_i32_2 = arith.constant 0 : i32
    return %arg0, %arg1, %c0_i32, %c0_i32_0, %c0_i32_1 : i32, i32, i32, i32, i32
  }
  func.func @transform_1(%arg0: i32, %arg1: i32) -> (i32, i32, i32, i32) {
    %c0_i32 = arith.constant 0 : i32
    %c0_i32_0 = arith.constant 0 : i32
    %c0_i32_1 = arith.constant 0 : i32
    return %arg0, %arg1, %c0_i32, %c0_i32_0 : i32, i32, i32, i32
  }
}

</mosaic_0001>

<llo_original>
// kernel: zero_padding_layer.1
$region0: #{zero_padding_layer.1}
  #allocation0 [shape = 'u32[]', space=smem, size = 0x4, offset = 0x4, fixed_abs, tag = 'smem constant byte address 0x4 - core index']
  #allocation1 [shape = 'u32[144,128]{1,0:T(1,128)}', space=vmem, size = 0x12000, scoped, tag = 'internal scratch']
  %s0 = inlined_call_operand.vmem [shape: f32[2,8,2,16,4], index: 0, kind: input, shape index: {}]
  %s1 = inlined_call_operand.vmem [shape: f32[2,8,8,8], index: 1, kind: output, shape index: {}]
  %s2 = sld [smem:[#allocation0]]
  $region75: #{zero_padding_layer.1} parent=0
    _
  %s4 = ssub.s32 1, %s2
  %s5 = scalar_select 0, %s4, %s2
  $region1: #{zero_padding_layer.1} parent=0
    #allocation2 [shape = 'u8[131072]{0}', space=vmem, size = 0x20000, scoped, tag = 'input window, operand 0']
    loop: start=0, step=1, limit=4
    $region2: #{zero_padding_layer.1} parent=1 // loop_pre_header
      _
    $region3: #{zero_padding_layer.1} parent=1 // loop_header
      %s7 = sphi 0, %s11
      %p8 = scmp.ge.s32.totalorder %s7, 4
      %s14 = sphi 0, %s26
      %s15 = sphi 0, %s22
      %s16 = sphi 0, %s14
      %s17 = sphi 0, %s15
      %s18 = sphi 0, %s16
      %s19 = sphi 0, %s17
      %s31 = sphi 0, %s33
      %s34 = sphi 0, %s31
      %s35 = sphi 0, %s34
      %s51 = sphi 0, %s35
      %s59 = sphi 0, %s61
      %s62 = sphi 0, %s59
      %s63 = sphi 0, %s62
      %s79 = sphi 0, %s63
    $region4: #{zero_padding_layer.1} parent=1 // loop_header_branch
      %10 = sbr.rel (%p8) target = $region8
    $region5: #{zero_padding_layer.1} parent=1 // loop_body
      %s12 = ssub.s32 %s7, 1
      %s13 = ssub.s32 %s7, 2
      %s20 = sadd.s32 1, %s15
      %p21 = scmp.ge.s32.totalorder %s20, 1
      %s22 = scalar_select %p21, 0, %s20
      %s23 = sadd.s32 1, %s14
      %s24 = scalar_select %p21, %s23, %s14
      %p25 = scmp.ge.s32.totalorder %s24, 2
      %s26 = scalar_select %p25, 0, %s24
      %s27 = ssub.s32 %s14, %s26
      %s28 = ssub.s32 %s15, %s22
      %s29 = sor.u32 %s27, %s28
      %p30 = scmp.eq.s32.totalorder %s29, 0
      %s32 = sadd.s32 %s31, 1
      %s33 = scalar_select %p30, %s31, %s32
      %p36 = pneg %p30
      %p37 = scmp.eq.s32.totalorder %s7, 1
      %p38 = por %p36, %p37
      %p39 = scmp.ne.s32.totalorder %s31, %s34
      %p40 = scmp.eq.s32.totalorder %s7, 0
      %p41 = por %p39, %p40
      %p42 = scmp.ne.s32.totalorder %s31, %s34
      %p43 = scmp.eq.s32.totalorder %s12, 1
      %p44 = por %p42, %p43
      %p45 = scmp.ne.s32.totalorder %s34, %s35
      %p46 = scmp.eq.s32.totalorder %s12, 0
      %p47 = por %p45, %p46
      %p48 = scmp.ne.s32.totalorder %s34, %s35
      %p49 = scmp.eq.s32.totalorder %s13, 1
      %p50 = por %p48, %p49
      %p52 = scmp.ne.s32.totalorder %s35, %s51
      %p53 = scmp.eq.s32.totalorder %s13, 0
      %p54 = por %p52, %p53
      %s55 = ssub.s32 %s14, %s26
      %s56 = ssub.s32 %s15, %s22
      %s57 = sor.u32 %s55, %s56
      %p58 = scmp.eq.s32.totalorder %s57, 0
      %s60 = sadd.s32 %s59, 1
      %s61 = scalar_select %p58, %s59, %s60
      %p64 = pneg %p58
      %p65 = scmp.eq.s32.totalorder %s7, 1
      %p66 = por %p64, %p65
      %p67 = scmp.ne.s32.totalorder %s59, %s62
      %p68 = scmp.eq.s32.totalorder %s7, 0
      %p69 = por %p67, %p68
      %p70 = scmp.ne.s32.totalorder %s59, %s62
      %p71 = scmp.eq.s32.totalorder %s12, 1
      %p72 = por %p70, %p71
      %p73 = scmp.ne.s32.totalorder %s62, %s63
      %p74 = scmp.eq.s32.totalorder %s12, 0
      %p75 = por %p73, %p74
      %p76 = scmp.ne.s32.totalorder %s62, %s63
      %p77 = scmp.eq.s32.totalorder %s13, 1
      %p78 = por %p76, %p77
      %p80 = scmp.ne.s32.totalorder %s63, %s79
      %p81 = scmp.eq.s32.totalorder %s13, 0
      %p82 = por %p80, %p81
      %p83 = scmp.le.s32.totalorder 1, %s7
      %p84 = scmp.lt.s32.totalorder %s7, 3
      %p85 = pnand %p83, %p84
      %p86 = pneg %p85
      // Predicated region
      $region9: #{zero_padding_layer.1} parent=5 // pred_check
        _
      $region10: #{zero_padding_layer.1} parent=5 // pred_check_branch
        %88 = sbr.rel (%p85) target = $region12
      $region11: #{zero_padding_layer.1} parent=5 // pred_region
        %s89 = ssub.s32 %s7, 1
      $region12: #{zero_padding_layer.1} parent=5 // pred_fallthru
        _
      %p90 = scmp.lt.s32.totalorder %s7, 2
      // Predicated region
      $region13: #{zero_padding_layer.1} parent=5 // pred_check
        %p91 = pneg %p90
      $region14: #{zero_padding_layer.1} parent=5 // pred_check_branch
        %93 = sbr.rel (%p91) target = $region16
      $region15: #{zero_padding_layer.1} parent=5 // pred_region
        // Predicated region
        $region17: #{zero_padding_layer.1} parent=15 // pred_check
          %p94 = pneg %p41
        $region18: #{zero_padding_layer.1} parent=15 // pred_check_branch
          %96 = sbr.rel (%p94) target = $region20
        $region19: #{zero_padding_layer.1} parent=15 // pred_region
          %s97 = sand.u32 %s31, 1
          %s98 = sand.u32 %s31, 1
          %s99 = smul.addr %s98, 128
          %s100 = scalar_lea.vmem [#allocation2], %s99
          %s101 = smul.u32 8, %s15
          %s102 = smul.addr %s101, 4
          %s103 = smul.addr %s14, 32
          %s104 = sadd.s32 %s102, %s103
          %s105 = smul.addr %s104, 8
          %s106 = scalar_lea.vmem %s0, %s105
          // Predicated region
          $region21: #{zero_padding_layer.1} parent=19 // pred_check
            _
          $region22: #{zero_padding_layer.1} parent=19 // pred_check_branch
            %108 = sbr.rel (0) target = $region24
          $region23: #{zero_padding_layer.1} parent=19 // pred_region
            // Predicated region
            $region25: #{zero_padding_layer.1} parent=23 // pred_check
              _
            $region26: #{zero_padding_layer.1} parent=23 // pred_check_branch
              %110 = sbr.rel (0) target = $region28
            $region27: #{zero_padding_layer.1} parent=23 // pred_region
              // Predicated region
              $region40: #{zero_padding_layer.1} parent=27 // pred_check
                _
              $region41: #{zero_padding_layer.1} parent=27 // pred_check_branch
                %156 = sbr.rel (0) target = $region43
              $region42: #{zero_padding_layer.1} parent=27 // pred_region
                loop: start=0, step=1, limit=1
                $region44: #{zero_padding_layer.1} parent=42 // loop_pre_header
                  _
                $region45: #{zero_padding_layer.1} parent=42 // loop_header
                  %s158 = sphi 0, %s162
                  %p159 = scmp.ge.s32.totalorder %s158, 1
                  %s163 = sphi %s106, %s106
                  %s164 = sphi %s100, %s100
                $region46: #{zero_padding_layer.1} parent=42 // loop_header_branch
                  %161 = sbr.rel (%p159) target = $region50
                $region47: #{zero_padding_layer.1} parent=42 // loop_body
                  %v165 = vld [vmem:[%s163] sm:$0xff]
                  %166 = vst [vmem:[%s164] sm:$0xff] %v165
                  %v167 = vld [vmem:[%s163 + $0x8] sm:$0xff]
                  %168 = vst [vmem:[%s164 + $0x8] sm:$0xff] %v167
                  %v169 = vld [vmem:[%s163 + $0x20] sm:$0xff]
                  %170 = vst [vmem:[%s164 + $0x10] sm:$0xff] %v169
                  %v171 = vld [vmem:[%s163 + $0x28] sm:$0xff]
                  %172 = vst [vmem:[%s164 + $0x18] sm:$0xff] %v171
                  %v173 = vld [vmem:[%s163 + $0x40] sm:$0xff]
                  %174 = vst [vmem:[%s164 + $0x20] sm:$0xff] %v173
                  %v175 = vld [vmem:[%s163 + $0x48] sm:$0xff]
                  %176 = vst [vmem:[%s164 + $0x28] sm:$0xff] %v175
                  %v177 = vld [vmem:[%s163 + $0x60] sm:$0xff]
                  %178 = vst [vmem:[%s164 + $0x30] sm:$0xff] %v177
                  %v179 = vld [vmem:[%s163 + $0x68] sm:$0xff]
                  %180 = vst [vmem:[%s164 + $0x38] sm:$0xff] %v179
                  %v181 = vld [vmem:[%s163 + $0x80] sm:$0xff]
                  %182 = vst [vmem:[%s164 + $0x40] sm:$0xff] %v181
                  %v183 = vld [vmem:[%s163 + $0x88] sm:$0xff]
                  %184 = vst [vmem:[%s164 + $0x48] sm:$0xff] %v183
                  %v185 = vld [vmem:[%s163 + $0xa0] sm:$0xff]
                  %186 = vst [vmem:[%s164 + $0x50] sm:$0xff] %v185
                  %v187 = vld [vmem:[%s163 + $0xa8] sm:$0xff]
                  %188 = vst [vmem:[%s164 + $0x58] sm:$0xff] %v187
                  %v189 = vld [vmem:[%s163 + $0xc0] sm:$0xff]
                  %190 = vst [vmem:[%s164 + $0x60] sm:$0xff] %v189
                  %v191 = vld [vmem:[%s163 + $0xc8] sm:$0xff]
                  %192 = vst [vmem:[%s164 + $0x68] sm:$0xff] %v191
                  %v193 = vld [vmem:[%s163 + $0xe0] sm:$0xff]
                  %194 = vst [vmem:[%s164 + $0x70] sm:$0xff] %v193
                  %v195 = vld [vmem:[%s163 + $0xe8] sm:$0xff]
                  %196 = vst [vmem:[%s164 + $0x78] sm:$0xff] %v195
                $region48: #{zero_padding_layer.1} parent=42 // loop_footer
                  %s162 = sadd.s32 1, %s158
                $region49: #{zero_padding_layer.1} parent=42 // loop_footer_branch
                  %157 = sbr.rel target = $region45
                $region50: #{zero_padding_layer.1} parent=42 // loop_exit
                  _
              $region43: #{zero_padding_layer.1} parent=27 // pred_fallthru
                _
              // Predicated region
              $region51: #{zero_padding_layer.1} parent=27 // pred_check
                _
              $region52: #{zero_padding_layer.1} parent=27 // pred_check_branch
                %198 = sbr.rel target = $region54
              $region53: #{zero_padding_layer.1} parent=27 // pred_region
                _
              $region54: #{zero_padding_layer.1} parent=27 // pred_fallthru
                _
            $region28: #{zero_padding_layer.1} parent=23 // pred_fallthru
              _
            // Predicated region
            $region29: #{zero_padding_layer.1} parent=23 // pred_check
              _
            $region30: #{zero_padding_layer.1} parent=23 // pred_check_branch
              %112 = sbr.rel target = $region32
            $region31: #{zero_padding_layer.1} parent=23 // pred_region
              %s114 = ssub.s32 256, 1
              loop: start=0, step=1, limit=1
              $region33: #{zero_padding_layer.1} parent=31 // loop_pre_header
                _
              $region34: #{zero_padding_layer.1} parent=31 // loop_header
                %s116 = sphi 0, %s120
                %p117 = scmp.ge.s32.totalorder %s116, 1
                %s121 = sphi %s106, %s106
                %s122 = sphi %s100, %s100
              $region35: #{zero_padding_layer.1} parent=31 // loop_header_branch
                %119 = sbr.rel (%p117) target = $region39
              $region36: #{zero_padding_layer.1} parent=31 // loop_body
                %v123 = vld [vmem:[%s121] sm:%s114]
                %124 = vst [vmem:[%s122] sm:%s114] %v123
                %v125 = vld [vmem:[%s121 + $0x8] sm:%s114]
                %126 = vst [vmem:[%s122 + $0x8] sm:%s114] %v125
                %v127 = vld [vmem:[%s121 + $0x20] sm:%s114]
                %128 = vst [vmem:[%s122 + $0x10] sm:%s114] %v127
                %v129 = vld [vmem:[%s121 + $0x28] sm:%s114]
                %130 = vst [vmem:[%s122 + $0x18] sm:%s114] %v129
                %v131 = vld [vmem:[%s121 + $0x40] sm:%s114]
                %132 = vst [vmem:[%s122 + $0x20] sm:%s114] %v131
                %v133 = vld [vmem:[%s121 + $0x48] sm:%s114]
                %134 = vst [vmem:[%s122 + $0x28] sm:%s114] %v133
                %v135 = vld [vmem:[%s121 + $0x60] sm:%s114]
                %136 = vst [vmem:[%s122 + $0x30] sm:%s114] %v135
                %v137 = vld [vmem:[%s121 + $0x68] sm:%s114]
                %138 = vst [vmem:[%s122 + $0x38] sm:%s114] %v137
                %v139 = vld [vmem:[%s121 + $0x80] sm:%s114]
                %140 = vst [vmem:[%s122 + $0x40] sm:%s114] %v139
                %v141 = vld [vmem:[%s121 + $0x88] sm:%s114]
                %142 = vst [vmem:[%s122 + $0x48] sm:%s114] %v141
                %v143 = vld [vmem:[%s121 + $0xa0] sm:%s114]
                %144 = vst [vmem:[%s122 + $0x50] sm:%s114] %v143
                %v145 = vld [vmem:[%s121 + $0xa8] sm:%s114]
                %146 = vst [vmem:[%s122 + $0x58] sm:%s114] %v145
                %v147 = vld [vmem:[%s121 + $0xc0] sm:%s114]
                %148 = vst [vmem:[%s122 + $0x60] sm:%s114] %v147
                %v149 = vld [vmem:[%s121 + $0xc8] sm:%s114]
                %150 = vst [vmem:[%s122 + $0x68] sm:%s114] %v149
                %v151 = vld [vmem:[%s121 + $0xe0] sm:%s114]
                %152 = vst [vmem:[%s122 + $0x70] sm:%s114] %v151
                %v153 = vld [vmem:[%s121 + $0xe8] sm:%s114]
                %154 = vst [vmem:[%s122 + $0x78] sm:%s114] %v153
              $region37: #{zero_padding_layer.1} parent=31 // loop_footer
                %s120 = sadd.s32 1, %s116
              $region38: #{zero_padding_layer.1} parent=31 // loop_footer_branch
                %115 = sbr.rel target = $region34
              $region39: #{zero_padding_layer.1} parent=31 // loop_exit
                _
            $region32: #{zero_padding_layer.1} parent=23 // pred_fallthru
              _
          $region24: #{zero_padding_layer.1} parent=19 // pred_fallthru
            _
          %199 = vnop
        $region20: #{zero_padding_layer.1} parent=15 // pred_fallthru
          _
      $region16: #{zero_padding_layer.1} parent=5 // pred_fallthru
        _
      %p200 = scmp.le.s32.totalorder 1, %s7
      %p201 = scmp.lt.s32.totalorder %s7, 3
      %p202 = pnand %p200, %p201
      %p203 = pneg %p202
      // Predicated region
      $region55: #{zero_padding_layer.1} parent=5 // pred_check
        _
      $region56: #{zero_padding_layer.1} parent=5 // pred_check_branch
        %205 = sbr.rel (%p202) target = $region58
      $region57: #{zero_padding_layer.1} parent=5 // pred_region
        %s206 = ssub.s32 %s7, 1
        %s207 = sand.u32 %s34, 1
        %s208 = sand.u32 %s34, 1
        %s209 = smul.addr %s208, 128
        %s210 = scalar_lea.vmem [#allocation2], %s209
        // Predicated region
        $region59: #{zero_padding_layer.1} parent=57 // pred_check
          %p211 = pneg %p47
        $region60: #{zero_padding_layer.1} parent=57 // pred_check_branch
          %213 = sbr.rel (%p211) target = $region62
        $region61: #{zero_padding_layer.1} parent=57 // pred_region
          _
        $region62: #{zero_padding_layer.1} parent=57 // pred_fallthru
          _
        %s214 = sand.u32 %s34, 1
        %s215 = sand.u32 %s34, 1
        %s216 = smul.addr %s215, 128
        %s217 = scalar_lea.vmem [#allocation2], %s216
        %p218 = pneg %p47
        %p219 = pneg %p44
        %p220 = pneg %p75
        %p221 = pneg %p72
        %s222 = smul.u32 8, %s17
        %p223 = scmp.lt.s32.totalorder %s16, 1
        %s224 = scalar_select %p223, %s16, 1
        %p225 = scmp.lt.s32.totalorder %s222, 7
        %s226 = scalar_select %p225, %s222, 7
        %s227 = smul.addr %s224, 8
        %s228 = sadd.s32 %s226, %s227
        %s229 = smul.addr %s228, 8
        %s230 = scalar_lea.vmem %s1, %s229
        %s231 = smul.u32 8, %s17
        %s232 = smul.u32 8, %s17
        %p233 = scmp.lt.s32.totalorder %s16, 1
        %s234 = scalar_select %p233, %s16, 1
        %p235 = scmp.lt.s32.totalorder %s232, 7
        %s236 = scalar_select %p235, %s232, 7
        %s237 = smul.addr %s234, 8
        %s238 = sadd.s32 %s236, %s237
        %s239 = smul.addr %s238, 8
        %s240 = scalar_lea.vmem %s1, %s239
        %s241 = smul.u32 8, %s17
        %v242 = vld [vmem:[%s210] ss:$2 sm:$0xff]
        %s243 = scalar_lea.vmem %s210, 16 [#allocation2]
        %v244 = vld [vmem:[%s243] ss:$2 sm:$0xff]
        %s245 = scalar_lea.vmem %s210, 32 [#allocation2]
        %v246 = vld [vmem:[%s245] ss:$2 sm:$0xff]
        %s247 = scalar_lea.vmem %s210, 48 [#allocation2]
        %v248 = vld [vmem:[%s247] ss:$2 sm:$0xff]
        %s249 = scalar_lea.vmem %s210, 64 [#allocation2]
        %v250 = vld [vmem:[%s249] ss:$2 sm:$0xff]
        %s251 = scalar_lea.vmem %s210, 80 [#allocation2]
        %v252 = vld [vmem:[%s251] ss:$2 sm:$0xff]
        %s253 = scalar_lea.vmem %s210, 96 [#allocation2]
        %v254 = vld [vmem:[%s253] ss:$2 sm:$0xff]
        %s255 = scalar_lea.vmem %s210, 112 [#allocation2]
        %v256 = vld [vmem:[%s255] ss:$2 sm:$0xff]
        %vm257 = vcmask 64512
        %258 = vst.msk [vmem:[%s240] sm:$0xff] %vm257, 0.0
        %259 = vst.msk [vmem:[%s240 + $0x8] sm:$0xff] %vm257, 0.0
        %260 = vst.msk [vmem:[%s240 + $0x10] sm:$0xff] %vm257, 0.0
        %261 = vst.msk [vmem:[%s240 + $0x18] sm:$0xff] %vm257, 0.0
        %262 = vst.msk [vmem:[%s240 + $0x20] sm:$0xff] %vm257, 0.0
        %263 = vst.msk [vmem:[%s240 + $0x28] sm:$0xff] %vm257, 0.0
        %264 = vst.msk [vmem:[%s240 + $0x30] sm:$0xff] %vm257, 0.0
        %265 = vst.msk [vmem:[%s240 + $0x38] sm:$0xff] %vm257, 0.0
        %274 = vrot.lane.b32.xlu0 %v242, 2
        %v275 = vpop.permute.xlu0 %274
        %276 = vrot.lane.b32.xlu0 %v244, 2
        %v277 = vpop.permute.xlu0 %276
        %278 = vrot.lane.b32.xlu0 %v246, 2
        %v279 = vpop.permute.xlu0 %278
        %280 = vrot.lane.b32.xlu0 %v248, 2
        %v281 = vpop.permute.xlu0 %280
        %282 = vrot.lane.b32.xlu0 %v250, 2
        %v283 = vpop.permute.xlu0 %282
        %284 = vrot.lane.b32.xlu0 %v252, 2
        %v285 = vpop.permute.xlu0 %284
        %286 = vrot.lane.b32.xlu0 %v254, 2
        %v287 = vpop.permute.xlu0 %286
        %288 = vrot.lane.b32.xlu0 %v256, 2
        %v289 = vpop.permute.xlu0 %288
        %vm298 = vcmask 48144
        %299 = vst.msk [vmem:[%s240] sm:$0xff] %vm298, %v275
        %300 = vst.msk [vmem:[%s240 + $0x8] sm:$0xff] %vm298, %v277
        %301 = vst.msk [vmem:[%s240 + $0x10] sm:$0xff] %vm298, %v279
        %302 = vst.msk [vmem:[%s240 + $0x18] sm:$0xff] %vm298, %v281
        %303 = vst.msk [vmem:[%s240 + $0x20] sm:$0xff] %vm298, %v283
        %304 = vst.msk [vmem:[%s240 + $0x28] sm:$0xff] %vm298, %v285
        %305 = vst.msk [vmem:[%s240 + $0x30] sm:$0xff] %vm298, %v287
        %306 = vst.msk [vmem:[%s240 + $0x38] sm:$0xff] %vm298, %v289
        %s307 = smul.u32 8, %s17
        %p308 = scmp.lt.s32.totalorder %s16, 1
        %s309 = scalar_select %p308, %s16, 1
        %p310 = scmp.lt.s32.totalorder %s307, 7
        %s311 = scalar_select %p310, %s307, 7
        %s312 = smul.addr %s309, 8
        %s313 = sadd.s32 %s311, %s312
        %s314 = smul.addr %s313, 8
        %s315 = scalar_lea.vmem %s1, %s314
        // Predicated region
        $region63: #{zero_padding_layer.1} parent=57 // pred_check
          %p316 = pneg %p72
        $region64: #{zero_padding_layer.1} parent=57 // pred_check_branch
          %318 = sbr.rel (%p316) target = $region66
        $region65: #{zero_padding_layer.1} parent=57 // pred_region
          %s319 = smul.u32 8, %s17
        $region66: #{zero_padding_layer.1} parent=57 // pred_fallthru
          _
      $region58: #{zero_padding_layer.1} parent=5 // pred_fallthru
        _
      %p320 = scmp.le.s32.totalorder 2, %s7
      // Predicated region
      $region67: #{zero_padding_layer.1} parent=5 // pred_check
        %p321 = pneg %p320
      $region68: #{zero_padding_layer.1} parent=5 // pred_check_branch
        %323 = sbr.rel (%p321) target = $region70
      $region69: #{zero_padding_layer.1} parent=5 // pred_region
        %s324 = ssub.s32 %s7, 2
        // Predicated region
        $region71: #{zero_padding_layer.1} parent=69 // pred_check
          %p325 = pneg %p78
        $region72: #{zero_padding_layer.1} parent=69 // pred_check_branch
          %327 = sbr.rel (%p325) target = $region74
        $region73: #{zero_padding_layer.1} parent=69 // pred_region
          %s328 = smul.u32 8, %s19
          %p329 = scmp.lt.s32.totalorder %s18, 1
          %s330 = scalar_select %p329, %s18, 1
          %p331 = scmp.lt.s32.totalorder %s328, 7
          %s332 = scalar_select %p331, %s328, 7
          %s333 = smul.addr %s330, 8
          %s334 = sadd.s32 %s332, %s333
          %s335 = smul.addr %s334, 8
          %s336 = scalar_lea.vmem %s1, %s335
        $region74: #{zero_padding_layer.1} parent=69 // pred_fallthru
          _
      $region70: #{zero_padding_layer.1} parent=5 // pred_fallthru
        _
    $region6: #{zero_padding_layer.1} parent=1 // loop_footer
      %s11 = sadd.s32 1, %s7
    $region7: #{zero_padding_layer.1} parent=1 // loop_footer_branch
      %6 = sbr.rel target = $region3
    $region8: #{zero_padding_layer.1} parent=1 // loop_exit
      _

</llo_original>
